<compile_context>
chip_gen: v7x
topology: tpu7x:2x2x1
jax: 0.10.0
libtpu: 0.0.40
codegen_flags: <defaults>
</compile_context>

<pallas_src>
import jax
import jax.numpy as jnp
from jax import lax
from jax.experimental import pallas as pl
from jax.experimental.pallas import tpu as pltpu


def _round_up(n, m):
    return ((n + m - 1) // m) * m


def _ffn_kernel(x_ref, wg_ref, wu_ref, w2_ref, o_ref, acc_ref):
    # x_ref : (block_m, H)        activations (compute dtype, e.g. bf16)
    # wg_ref: (block_f, H)        gate rows of dense_h_to_4h.weight   (out, in)
    # wu_ref: (block_f, H)        up   rows of dense_h_to_4h.weight   (out, in)
    # w2_ref: (H, block_f)        columns of dense_4h_to_h.weight     (out, in)
    # o_ref : (block_m, H)        output block (resident across the F axis)
    # acc_ref:(block_m, H) f32    accumulator scratch
    f = pl.program_id(1)

    @pl.when(f == 0)
    def _():
        acc_ref[...] = jnp.zeros_like(acc_ref)

    x = x_ref[...]
    # Contract on the "in" (hidden) dimension: a = x @ Wg^T, b = x @ Wu^T.
    dims = (((1,), (1,)), ((), ()))
    a = lax.dot_general(x, wg_ref[...], dims, preferred_element_type=jnp.float32)
    b = lax.dot_general(x, wu_ref[...], dims, preferred_element_type=jnp.float32)

    # SiLU gate in fp32 (matches F.silu(x[0]) * x[1]).
    g = (a * jax.nn.sigmoid(a)) * b

    # Partial down-projection for this F tile: g @ W2_tile^T, fp32 accumulate.
    acc_ref[...] += lax.dot_general(
        g.astype(w2_ref.dtype), w2_ref[...], dims,
        preferred_element_type=jnp.float32)

    @pl.when(f == pl.num_programs(1) - 1)
    def _():
        o_ref[...] = acc_ref[...].astype(o_ref.dtype)


def feed_forward_pallas(x, w1, w2, *, block_m=256, block_f=512,
                        compute_dtype=jnp.bfloat16):
    """SwiGLU FFN forward.

    x : (..., H)
    w1: (2*F, H)  = dense_h_to_4h.weight  (PyTorch (out, in) layout, NOT transposed)
    w2: (H, F)    = dense_4h_to_h.weight  (PyTorch (out, in) layout, NOT transposed)
    """
    orig_shape = x.shape
    H = orig_shape[-1]
    two_f, h1 = w1.shape
    F = two_f // 2
    h2, f2 = w2.shape
    assert h1 == H and h2 == H and f2 == F

    out_dtype = x.dtype
    if compute_dtype is None:
        compute_dtype = x.dtype

    x2d = x.reshape(-1, H).astype(compute_dtype)
    M = x2d.shape[0]

    # --- M tiling: large tiles, pad the ragged tail once in the wrapper. ---
    block_m = min(block_m, _round_up(M, 8))
    m_pad = _round_up(M, block_m)
    if m_pad != M:
        x2d = jnp.pad(x2d, ((0, m_pad - M), (0, 0)))

    # --- F tiling (reduction axis of the down-projection). ---
    if F % block_f != 0:
        block_f = F  # small / ragged FFN dim: single F tile
    num_f = F // block_f

    w1c = w1.astype(compute_dtype)   # (2F, H), passed twice (gate rows / up rows)
    w2c = w2.astype(compute_dtype)   # (H, F)

    itemsize = jnp.dtype(compute_dtype).itemsize
    cost = pl.CostEstimate(
        flops=6 * M * H * F,                       # 2*M*H*2F + 2*M*F*H
        transcendentals=M * F,                     # sigmoid
        bytes_accessed=(x2d.size + w1c.size + w2c.size) * itemsize
        + m_pad * H * jnp.dtype(out_dtype).itemsize,
    )

    out = pl.pallas_call(
        _ffn_kernel,
        out_shape=jax.ShapeDtypeStruct((m_pad, H), out_dtype),
        grid_spec=pltpu.PrefetchScalarGridSpec(
            num_scalar_prefetch=0,
            grid=(m_pad // block_m, num_f),        # (M tiles, F tiles); F innermost
            in_specs=[
                pl.BlockSpec((block_m, H), lambda i, f: (i, 0)),          # x
                pl.BlockSpec((block_f, H), lambda i, f: (f, 0)),          # w1 gate rows
                pl.BlockSpec((block_f, H), lambda i, f: (num_f + f, 0)),  # w1 up rows
                pl.BlockSpec((H, block_f), lambda i, f: (0, f)),          # w2 columns
            ],
            out_specs=pl.BlockSpec((block_m, H), lambda i, f: (i, 0)),
            scratch_shapes=[pltpu.VMEM((block_m, H), jnp.float32)],
        ),
        compiler_params=pltpu.CompilerParams(
            dimension_semantics=("parallel", "arbitrary"),
            vmem_limit_bytes=48 * 1024 * 1024,
        ),
        cost_estimate=cost,
    )(x2d, w1c, w1c, w2c)

    if m_pad != M:
        out = out[:M]
    return out.reshape(orig_shape)


if __name__ == "__main__":
    # config: hidden_size=32, ffn_hidden_size=64, dtype=float32; batch=2, seq=8
    batch, seq, hidden, ffn = 2, 8, 32, 64
    dtype = jnp.float32

    key = jax.random.PRNGKey(0)
    kx, k1, k2 = jax.random.split(key, 3)

    x = jax.random.normal(kx, (batch, seq, hidden), dtype=dtype)
    # nn.Linear weight shapes: (out_features, in_features)
    w1 = jax.random.normal(k1, (ffn * 2, hidden), dtype=dtype) * 0.05
    w2 = jax.random.normal(k2, (hidden, ffn), dtype=dtype) * 0.05

    out = feed_forward_pallas(x, w1, w2)
    out = jax.block_until_ready(out)

    # sanity check against plain-JAX fp32 reference (same math as the torch
    # module); kernel uses bf16 matmuls with fp32 accumulation, so allow a
    # correspondingly loose tolerance.
    h = x @ w1.T
    a, b = h[..., :ffn], h[..., ffn:]
    ref = (jax.nn.silu(a) * b) @ w2.T
    assert out.shape == ref.shape and out.dtype == ref.dtype
    err = float(jnp.max(jnp.abs(out - ref)))
    assert jnp.allclose(out, ref, atol=2e-2, rtol=2e-2), err

    print("KERNEL_OK")
</pallas_src>

<mosaic_0001>
module attributes {stable_mosaic.version = 11 : i64} {
  func.func @_ffn_kernel(%arg0: i32, %arg1: i32, %arg2: memref<16x32xbf16, #tpu.memory_space<vmem>>, %arg3: memref<64x32xbf16, #tpu.memory_space<vmem>>, %arg4: memref<64x32xbf16, #tpu.memory_space<vmem>>, %arg5: memref<32x64xbf16, #tpu.memory_space<vmem>>, %arg6: memref<16x32xf32, #tpu.memory_space<vmem>>, %arg7: memref<16x32xf32, #tpu.memory_space<vmem>>) attributes {dimension_semantics = [#tpu.dimension_semantics<parallel>, #tpu.dimension_semantics<arbitrary>], iteration_bounds = array<i64: 1, 1>, scalar_prefetch = 0 : i64, scratch_operands = 1 : i64, tpu.core_type = #tpu.core_type<tc>, window_params = [{transform_indices = @transform_0, window_bounds = array<i64: 16, 32>}, {transform_indices = @transform_1, window_bounds = array<i64: 64, 32>}, {transform_indices = @transform_2, window_bounds = array<i64: 64, 32>}, {transform_indices = @transform_3, window_bounds = array<i64: 32, 64>}, {transform_indices = @transform_4, window_bounds = array<i64: 16, 32>}]} {
    %c0_i32 = arith.constant 0 : i32
    %0 = arith.cmpi eq, %arg1, %c0_i32 : i32
    %1 = arith.extui %0 : i1 to i32
    %c0_i32_0 = arith.constant 0 : i32
    %2 = arith.cmpi ne, %1, %c0_i32_0 : i32
    scf.if %2 {
      %cst_17 = arith.constant 0.000000e+00 : f32
      %24 = vector.broadcast %cst_17 : f32 to vector<16x32xf32>
      %c0_18 = arith.constant 0 : index
      %c0_19 = arith.constant 0 : index
      %25 = vector.load %arg7[%c0_18, %c0_19] : memref<16x32xf32, #tpu.memory_space<vmem>>, vector<16x32xf32>
      tpu.vector_store %arg7[%c0_18, %c0_19], %24 {strides = array<i32>} : memref<16x32xf32, #tpu.memory_space<vmem>>, vector<16x32xf32>,
    } else {
    }
    %c0 = arith.constant 0 : index
    %c0_1 = arith.constant 0 : index
    %3 = vector.load %arg2[%c0, %c0_1] : memref<16x32xbf16, #tpu.memory_space<vmem>>, vector<16x32xbf16>
    %c0_2 = arith.constant 0 : index
    %c0_3 = arith.constant 0 : index
    %4 = vector.load %arg3[%c0_2, %c0_3] : memref<64x32xbf16, #tpu.memory_space<vmem>>, vector<64x32xbf16>
    %cst = arith.constant dense<0.000000e+00> : vector<16x64xf32>
    %5 = tpu.matmul %3, %4, %cst {dimension_numbers = #tpu.dot_dimension_numbers<[1], [1], [0], [0], [0, 0, 1, 0], [], []>} : vector<16x32xbf16>, vector<64x32xbf16>, vector<16x64xf32> -> vector<16x64xf32>
    %c0_4 = arith.constant 0 : index
    %c0_5 = arith.constant 0 : index
    %6 = vector.load %arg4[%c0_4, %c0_5] : memref<64x32xbf16, #tpu.memory_space<vmem>>, vector<64x32xbf16>
    %cst_6 = arith.constant dense<0.000000e+00> : vector<16x64xf32>
    %7 = tpu.matmul %3, %6, %cst_6 {dimension_numbers = #tpu.dot_dimension_numbers<[1], [1], [0], [0], [0, 0, 1, 0], [], []>} : vector<16x32xbf16>, vector<64x32xbf16>, vector<16x64xf32> -> vector<16x64xf32>
    %8 = arith.negf %5 : vector<16x64xf32>
    %9 = math.exp %8 : vector<16x64xf32>
    %cst_7 = arith.constant 1.000000e+00 : f32
    %10 = vector.broadcast %cst_7 : f32 to vector<16x64xf32>
    %11 = arith.addf %10, %9 : vector<16x64xf32>
    %12 = arith.divf %10, %11 : vector<16x64xf32>
    %13 = arith.mulf %5, %12 : vector<16x64xf32>
    %14 = arith.mulf %13, %7 : vector<16x64xf32>
    %c0_8 = arith.constant 0 : index
    %c0_9 = arith.constant 0 : index
    %15 = vector.load %arg7[%c0_8, %c0_9] : memref<16x32xf32, #tpu.memory_space<vmem>>, vector<16x32xf32>
    %16 = arith.truncf %14 : vector<16x64xf32> to vector<16x64xbf16>
    %c0_10 = arith.constant 0 : index
    %c0_11 = arith.constant 0 : index
    %17 = vector.load %arg5[%c0_10, %c0_11] : memref<32x64xbf16, #tpu.memory_space<vmem>>, vector<32x64xbf16>
    %cst_12 = arith.constant dense<0.000000e+00> : vector<16x32xf32>
    %18 = tpu.matmul %16, %17, %cst_12 {dimension_numbers = #tpu.dot_dimension_numbers<[1], [1], [0], [0], [0, 0, 1, 0], [], []>} : vector<16x64xbf16>, vector<32x64xbf16>, vector<16x32xf32> -> vector<16x32xf32>
    %19 = arith.addf %15, %18 : vector<16x32xf32>
    %c0_13 = arith.constant 0 : index
    %c0_14 = arith.constant 0 : index
    %20 = vector.load %arg7[%c0_13, %c0_14] : memref<16x32xf32, #tpu.memory_space<vmem>>, vector<16x32xf32>
    tpu.vector_store %arg7[%c0_13, %c0_14], %19 {strides = array<i32>} : memref<16x32xf32, #tpu.memory_space<vmem>>, vector<16x32xf32>,
    %c0_i32_15 = arith.constant 0 : i32
    %21 = arith.cmpi eq, %arg1, %c0_i32_15 : i32
    %22 = arith.extui %21 : i1 to i32
    %c0_i32_16 = arith.constant 0 : i32
    %23 = arith.cmpi ne, %22, %c0_i32_16 : i32
    scf.if %23 {
      %c0_17 = arith.constant 0 : index
      %c0_18 = arith.constant 0 : index
      %24 = vector.load %arg7[%c0_17, %c0_18] : memref<16x32xf32, #tpu.memory_space<vmem>>, vector<16x32xf32>
      %c0_19 = arith.constant 0 : index
      %c0_20 = arith.constant 0 : index
      %25 = vector.load %arg6[%c0_19, %c0_20] : memref<16x32xf32, #tpu.memory_space<vmem>>, vector<16x32xf32>
      tpu.vector_store %arg6[%c0_19, %c0_20], %24 {strides = array<i32>} : memref<16x32xf32, #tpu.memory_space<vmem>>, vector<16x32xf32>,
    } else {
    }
    return
  }
  func.func @transform_0(%arg0: i32, %arg1: i32) -> (i32, i32) {
    %c0_i32 = arith.constant 0 : i32
    %c0_i32_0 = arith.constant 0 : i32
    return %arg0, %c0_i32 : i32, i32
  }
  func.func @transform_1(%arg0: i32, %arg1: i32) -> (i32, i32) {
    %c0_i32 = arith.constant 0 : i32
    %c0_i32_0 = arith.constant 0 : i32
    return %arg1, %c0_i32 : i32, i32
  }
  func.func @transform_2(%arg0: i32, %arg1: i32) -> (i32, i32) {
    %c1_i32 = arith.constant 1 : i32
    %0 = arith.addi %c1_i32, %arg1 : i32
    %c0_i32 = arith.constant 0 : i32
    %c0_i32_0 = arith.constant 0 : i32
    return %0, %c0_i32 : i32, i32
  }
  func.func @transform_3(%arg0: i32, %arg1: i32) -> (i32, i32) {
    %c0_i32 = arith.constant 0 : i32
    %c0_i32_0 = arith.constant 0 : i32
    return %c0_i32, %arg1 : i32, i32
  }
  func.func @transform_4(%arg0: i32, %arg1: i32) -> (i32, i32) {
    %c0_i32 = arith.constant 0 : i32
    %c0_i32_0 = arith.constant 0 : i32
    return %arg0, %c0_i32 : i32, i32
  }
}

</mosaic_0001>

<llo_original>
// kernel: tpu_custom_call.1
$region0: #{tpu_custom_call.1}
  #allocation0 [shape = 'u32[]', space=smem, size = 0x4, offset = 0x4, fixed_abs, tag = 'smem constant byte address 0x4 - core index']
  #allocation1 [shape = 'u32[144,128]{1,0:T(1,128)}', space=vmem, size = 0x12000, scoped, tag = 'internal scratch']
  #allocation2 [shape = 'f32[16,32]{1,0:T(8,128)}', space=vmem, size = 0x2000, scoped, tag = 'scratch operand']
  %s0 = inlined_call_operand.vmem [shape: bf16[16,32], index: 0, kind: input, shape index: {}]
  %s1 = inlined_call_operand.vmem [shape: bf16[128,32], index: 1, kind: input, shape index: {}]
  %s2 = inlined_call_operand.vmem [shape: bf16[128,32], index: 2, kind: input, shape index: {}]
  %s3 = inlined_call_operand.vmem [shape: bf16[32,64], index: 3, kind: input, shape index: {}]
  %s4 = inlined_call_operand.hbm [shape: f32[16,32], index: 4, kind: output, shape index: {}]
  %s5 = sld [smem:[#allocation0]]
  $region34: #{tpu_custom_call.1} parent=0
    _
  %s7 = ssub.s32 1, %s5
  %s8 = scalar_select 0, %s7, %s5
  $region1: #{tpu_custom_call.1} parent=0
    #allocation3 [shape = 'u8[8192]{0}', space=vmem, size = 0x2000, scoped, tag = 'output window, operand 0, single buffered']
    #allocation4 [shape = 's32[1]{0}', space=sflag, size = 0x4, scoped, tag = 'scoped memory for tpu_custom_call.1']
    %9 = vsyncpa [#allocation4], 0
    // Predicated region
    $region2: #{tpu_custom_call.1} parent=1 // pred_check
      _
    $region3: #{tpu_custom_call.1} parent=1 // pred_check_branch
      %11 = sbr.rel (0) target = $region5
    $region4: #{tpu_custom_call.1} parent=1 // pred_region
      _
    $region5: #{tpu_custom_call.1} parent=1 // pred_fallthru
      _
    // Predicated region
    $region6: #{tpu_custom_call.1} parent=1 // pred_check
      _
    $region7: #{tpu_custom_call.1} parent=1 // pred_check_branch
      %13 = sbr.rel (0) target = $region9
    $region8: #{tpu_custom_call.1} parent=1 // pred_region
      _
    $region9: #{tpu_custom_call.1} parent=1 // pred_fallthru
      _
    // Predicated region
    $region10: #{tpu_custom_call.1} parent=1 // pred_check
      _
    $region11: #{tpu_custom_call.1} parent=1 // pred_check_branch
      %15 = sbr.rel (0) target = $region13
    $region12: #{tpu_custom_call.1} parent=1 // pred_region
      %s16 = sadd.s32 0, 1
      %s17 = smul.u32 8, %s16
      %p18 = scmp.lt.s32.totalorder %s17, 15
      %s19 = scalar_select %p18, %s17, 15
      %s20 = smul.addr %s19, 4
      %s21 = scalar_lea.vmem %s2, %s20
      %s22 = sadd.s32 0, 1
      %s23 = smul.u32 8, %s22
    $region13: #{tpu_custom_call.1} parent=1 // pred_fallthru
      _
    // Predicated region
    $region14: #{tpu_custom_call.1} parent=1 // pred_check
      _
    $region15: #{tpu_custom_call.1} parent=1 // pred_check_branch
      %25 = sbr.rel (0) target = $region17
    $region16: #{tpu_custom_call.1} parent=1 // pred_region
      _
    $region17: #{tpu_custom_call.1} parent=1 // pred_fallthru
      _
    %s26 = sadd.s32 0, 1
    %s27 = smul.u32 8, %s26
    %p28 = scmp.lt.s32.totalorder %s27, 15
    %s29 = scalar_select %p28, %s27, 15
    %s30 = smul.addr %s29, 4
    %s31 = scalar_lea.vmem %s2, %s30
    %s32 = sadd.s32 0, 1
    %s33 = smul.u32 8, %s32
    %p34 = scmp.lt.s32.totalorder %s33, 15
    %s35 = scalar_select %p34, %s33, 15
    %s36 = smul.addr %s35, 4
    %s37 = scalar_lea.vmem %s2, %s36
    %s38 = sadd.s32 0, 1
    %s39 = smul.u32 8, %s38
    %p41 = scmp.eq.s32.totalorder 0, 0
    // Predicated region
    $region18: #{tpu_custom_call.1} parent=1 // pred_check
      %p42 = pneg %p41
    $region19: #{tpu_custom_call.1} parent=1 // pred_check_branch
      %44 = sbr.rel (%p42) target = $region21
    $region20: #{tpu_custom_call.1} parent=1 // pred_region
      %vm45 = vcmask 261120
      %46 = vst.msk [vmem:[#allocation2] sm:$0xff] %vm45, 0.0
      %47 = vst.msk [vmem:[#allocation2 + $0x8] sm:$0xff] %vm45, 0.0
    $region21: #{tpu_custom_call.1} parent=1 // pred_fallthru
      _
    %v48 = vld [vmem:[%s0] sm:$0xf]
    %v49 = vld [vmem:[%s0 + $0x4] sm:$0xf]
    %v50 = vld [vmem:[%s1] sm:$0xf]
    %v51 = vld [vmem:[%s1 + $0x4] sm:$0xf]
    %v52 = vld [vmem:[%s1 + $0x8] sm:$0xf]
    %v53 = vld [vmem:[%s1 + $0xc] sm:$0xf]
    %v54 = vld [vmem:[%s1 + $0x10] sm:$0xf]
    %v55 = vld [vmem:[%s1 + $0x14] sm:$0xf]
    %v56 = vld [vmem:[%s1 + $0x18] sm:$0xf]
    %v57 = vld [vmem:[%s1 + $0x1c] sm:$0xf]
    %v60 = vunpack.c.l.b16 %v48
    %v61 = vunpack.c.l.b16 %v49
    %v62 = vpack.c.b16 %v61, %v60
    %v71 = vunpack.c.l.b16 %v50
    %v72 = vunpack.c.l.b16 %v51
    %v73 = vunpack.c.l.b16 %v52
    %v74 = vunpack.c.l.b16 %v53
    %v75 = vunpack.c.l.b16 %v54
    %v76 = vunpack.c.l.b16 %v55
    %v77 = vunpack.c.l.b16 %v56
    %v78 = vunpack.c.l.b16 %v57
    %v79 = vpack.c.b16 %v72, %v71
    %v80 = vpack.c.b16 %v74, %v73
    %v81 = vpack.c.b16 %v76, %v75
    %v82 = vpack.c.b16 %v78, %v77
    %vm83 = vcmask 261120
    %v85 = vsel %vm83, %v62, 0
    %v88 = vsel %vm83, %v79, 0
    %v91 = vsel %vm83, %v80, 0
    %v94 = vsel %vm83, %v81, 0
    %v97 = vsel %vm83, %v82, 0
    %99 = vmatprep.subr.bf16.mxu0 0
    %100 = vmatpush1.bf16.xpose.msra.mxu0 %v88
    %101 = vmatprep.subr.bf16.mxu0 0
    %102 = vmatpush1.bf16.xpose.msra.mxu0 %v91
    %103 = vmatprep.subr.bf16.mxu0 0
    %104 = vmatpush1.bf16.xpose.msra.mxu0 %v94
    %105 = vmatprep.subr.bf16.mxu0 0
    %106 = vmatpush1.bf16.xpose.msra.mxu0 %v97
    %107 = vmatprep.subr.bf16.mxu0 0
    %108 = vmatpush1.bf16.xpose.msra.mxu0 0
    %109 = vmatprep.subr.bf16.mxu0 0
    %110 = vmatpush1.bf16.xpose.msra.mxu0 0
    %111 = vmatprep.subr.bf16.mxu0 0
    %112 = vmatpush1.bf16.xpose.msra.mxu0 0
    %113 = vmatprep.subr.bf16.mxu0 0
    %114 = vmatpush1.bf16.xpose.msra.mxu0 0
    %115 = vmatprep.subr.bf16.mxu0 0
    %116 = vmatpush1.bf16.xpose.msra.mxu0 0
    %117 = vmatprep.subr.bf16.mxu0 0
    %118 = vmatpush1.bf16.xpose.msra.mxu0 0
    %119 = vmatprep.subr.bf16.mxu0 0
    %120 = vmatpush1.bf16.xpose.msra.mxu0 0
    %121 = vmatprep.subr.bf16.mxu0 0
    %122 = vmatpush1.bf16.xpose.msra.mxu0 0
    %123 = vmatprep.subr.bf16.mxu0 0
    %124 = vmatpush1.bf16.xpose.msra.mxu0 0
    %125 = vmatprep.subr.bf16.mxu0 0
    %126 = vmatpush1.bf16.xpose.msra.mxu0 0
    %127 = vmatprep.subr.bf16.mxu0 0
    %128 = vmatpush1.bf16.xpose.msra.mxu0 0
    %129 = vmatprep.subr.bf16.mxu0 0
    %130 = vmatpush1.bf16.xpose.msra.mxu0 0
    %131 = vmatprep.mubr.bf16.mxu0 0
    %132 = vmatmul.mubr.bf16.gmra.mrb[0].mxu0 %v85
    %v133 = vpop.f32.mrb[0].mxu0
    %v134 = vadd.f32 0.0, %v133
    %v135 = vpop.f32.mrb[0].mxu0
    %v136 = vpop.f32.mrb[0].mxu0
    %v137 = vadd.f32 0.0, %v136
    %v138 = vpop.f32.mrb[0].mxu0
    %139 = vdwg.mxu0
    %v140 = vld [vmem:[%s37] sm:$0xf]
    %v141 = vld [vmem:[%s37 + $0x4] sm:$0xf]
    %v142 = vld [vmem:[%s37 + $0x8] sm:$0xf]
    %v143 = vld [vmem:[%s37 + $0xc] sm:$0xf]
    %v144 = vld [vmem:[%s37 + $0x10] sm:$0xf]
    %v145 = vld [vmem:[%s37 + $0x14] sm:$0xf]
    %v146 = vld [vmem:[%s37 + $0x18] sm:$0xf]
    %v147 = vld [vmem:[%s37 + $0x1c] sm:$0xf]
    %v156 = vunpack.c.l.b16 %v140
    %v157 = vunpack.c.l.b16 %v141
    %v158 = vunpack.c.l.b16 %v142
    %v159 = vunpack.c.l.b16 %v143
    %v160 = vunpack.c.l.b16 %v144
    %v161 = vunpack.c.l.b16 %v145
    %v162 = vunpack.c.l.b16 %v146
    %v163 = vunpack.c.l.b16 %v147
    %v164 = vpack.c.b16 %v157, %v156
    %v165 = vpack.c.b16 %v159, %v158
    %v166 = vpack.c.b16 %v161, %v160
    %v167 = vpack.c.b16 %v163, %v162
    %v169 = vsel %vm83, %v164, 0
    %v172 = vsel %vm83, %v165, 0
    %v175 = vsel %vm83, %v166, 0
    %v178 = vsel %vm83, %v167, 0
    %180 = vmatprep.subr.bf16.mxu0 0
    %181 = vmatpush1.bf16.xpose.msra.mxu0 %v169
    %182 = vmatprep.subr.bf16.mxu0 0
    %183 = vmatpush1.bf16.xpose.msra.mxu0 %v172
    %184 = vmatprep.subr.bf16.mxu0 0
    %185 = vmatpush1.bf16.xpose.msra.mxu0 %v175
    %186 = vmatprep.subr.bf16.mxu0 0
    %187 = vmatpush1.bf16.xpose.msra.mxu0 %v178
    %188 = vmatprep.subr.bf16.mxu0 0
    %189 = vmatpush1.bf16.xpose.msra.mxu0 0
    %190 = vmatprep.subr.bf16.mxu0 0
    %191 = vmatpush1.bf16.xpose.msra.mxu0 0
    %192 = vmatprep.subr.bf16.mxu0 0
    %193 = vmatpush1.bf16.xpose.msra.mxu0 0
    %194 = vmatprep.subr.bf16.mxu0 0
    %195 = vmatpush1.bf16.xpose.msra.mxu0 0
    %196 = vmatprep.subr.bf16.mxu0 0
    %197 = vmatpush1.bf16.xpose.msra.mxu0 0
    %198 = vmatprep.subr.bf16.mxu0 0
    %199 = vmatpush1.bf16.xpose.msra.mxu0 0
    %200 = vmatprep.subr.bf16.mxu0 0
    %201 = vmatpush1.bf16.xpose.msra.mxu0 0
    %202 = vmatprep.subr.bf16.mxu0 0
    %203 = vmatpush1.bf16.xpose.msra.mxu0 0
    %204 = vmatprep.subr.bf16.mxu0 0
    %205 = vmatpush1.bf16.xpose.msra.mxu0 0
    %206 = vmatprep.subr.bf16.mxu0 0
    %207 = vmatpush1.bf16.xpose.msra.mxu0 0
    %208 = vmatprep.subr.bf16.mxu0 0
    %209 = vmatpush1.bf16.xpose.msra.mxu0 0
    %210 = vmatprep.subr.bf16.mxu0 0
    %211 = vmatpush1.bf16.xpose.msra.mxu0 0
    %212 = vmatprep.mubr.bf16.mxu0 0
    %213 = vmatmul.mubr.bf16.gmra.mrb[0].mxu0 %v85
    %v214 = vpop.f32.mrb[0].mxu0
    %v215 = vadd.f32 0.0, %v214
    %v216 = vpop.f32.mrb[0].mxu0
    %v217 = vpop.f32.mrb[0].mxu0
    %v218 = vadd.f32 0.0, %v217
    %v219 = vpop.f32.mrb[0].mxu0
    %220 = vdwg.mxu0
    %v221 = vxor.u32 %v134, 2147483648
    %v222 = vxor.u32 %v137, 2147483648
    %v223 = vmul.f32 %v221, 1.442695
    %v224 = vpow.pop %v223
    %v225 = vmul.f32 %v222, 1.442695
    %v226 = vpow.pop %v225
    %v227 = vadd.f32 %v224, 1.0
    %v228 = vadd.f32 %v226, 1.0
    %v229 = vrcp.pop %v227
    %v230 = vmul.f32 1.0, %v229
    %v231 = vrcp.pop %v228
    %v232 = vmul.f32 1.0, %v231
    %v233 = vmul.f32 %v134, %v230
    %v234 = vmul.f32 %v137, %v232
    %v235 = vmul.f32 %v233, %v215
    %v236 = vmul.f32 %v234, %v218
    %v237 = vld [vmem:[#allocation2] sm:$0xff]
    %v238 = vld [vmem:[#allocation2 + $0x8] sm:$0xff]
    %v239 = vpack.c.bf16 %v236, %v235
    %v240 = vld [vmem:[%s3] sm:$0xf]
    %v241 = vld [vmem:[%s3 + $0x4] sm:$0xf]
    %v242 = vld [vmem:[%s3 + $0x8] sm:$0xf]
    %v243 = vld [vmem:[%s3 + $0xc] sm:$0xf]
    %v248 = vunpack.c.l.b16 %v240
    %v249 = vunpack.c.l.b16 %v241
    %v250 = vunpack.c.l.b16 %v242
    %v251 = vunpack.c.l.b16 %v243
    %v252 = vpack.c.b16 %v249, %v248
    %v253 = vpack.c.b16 %v251, %v250
    %vm254 = vcmask 523264
    %v256 = vsel %vm254, %v239, 0
    %v259 = vsel %vm254, %v252, 0
    %v262 = vsel %vm254, %v253, 0
    %264 = vmatprep.subr.bf16.mxu0 0
    %265 = vmatpush1.bf16.xpose.msra.mxu0 %v259
    %266 = vmatprep.subr.bf16.mxu0 0
    %267 = vmatpush1.bf16.xpose.msra.mxu0 %v262
    %268 = vmatprep.subr.bf16.mxu0 0
    %269 = vmatpush1.bf16.xpose.msra.mxu0 0
    %270 = vmatprep.subr.bf16.mxu0 0
    %271 = vmatpush1.bf16.xpose.msra.mxu0 0
    %272 = vmatprep.subr.bf16.mxu0 0
    %273 = vmatpush1.bf16.xpose.msra.mxu0 0
    %274 = vmatprep.subr.bf16.mxu0 0
    %275 = vmatpush1.bf16.xpose.msra.mxu0 0
    %276 = vmatprep.subr.bf16.mxu0 0
    %277 = vmatpush1.bf16.xpose.msra.mxu0 0
    %278 = vmatprep.subr.bf16.mxu0 0
    %279 = vmatpush1.bf16.xpose.msra.mxu0 0
    %280 = vmatprep.subr.bf16.mxu0 0
    %281 = vmatpush1.bf16.xpose.msra.mxu0 0
    %282 = vmatprep.subr.bf16.mxu0 0
    %283 = vmatpush1.bf16.xpose.msra.mxu0 0
    %284 = vmatprep.subr.bf16.mxu0 0
    %285 = vmatpush1.bf16.xpose.msra.mxu0 0
    %286 = vmatprep.subr.bf16.mxu0 0
    %287 = vmatpush1.bf16.xpose.msra.mxu0 0
    %288 = vmatprep.subr.bf16.mxu0 0
    %289 = vmatpush1.bf16.xpose.msra.mxu0 0
    %290 = vmatprep.subr.bf16.mxu0 0
    %291 = vmatpush1.bf16.xpose.msra.mxu0 0
    %292 = vmatprep.subr.bf16.mxu0 0
    %293 = vmatpush1.bf16.xpose.msra.mxu0 0
    %294 = vmatprep.subr.bf16.mxu0 0
    %295 = vmatpush1.bf16.xpose.msra.mxu0 0
    %296 = vmatprep.mubr.bf16.mxu0 0
    %297 = vmatmul.mubr.bf16.gmra.mrb[0].mxu0 %v256
    %v298 = vpop.f32.mrb[0].mxu0
    %v299 = vadd.f32 0.0, %v298
    %v300 = vpop.f32.mrb[0].mxu0
    %v301 = vpop.f32.mrb[0].mxu0
    %v302 = vadd.f32 0.0, %v301
    %v303 = vpop.f32.mrb[0].mxu0
    %304 = vdwg.mxu0
    %v305 = vadd.f32 %v237, %v299
    %v306 = vadd.f32 %v238, %v302
    %307 = vst.msk [vmem:[#allocation2] sm:$0xff] %vm83, %v305
    %308 = vst.msk [vmem:[#allocation2 + $0x8] sm:$0xff] %vm83, %v306
    // Predicated region
    $region22: #{tpu_custom_call.1} parent=1 // pred_check
      %p309 = pneg %p41
    $region23: #{tpu_custom_call.1} parent=1 // pred_check_branch
      %311 = sbr.rel (%p309) target = $region25
    $region24: #{tpu_custom_call.1} parent=1 // pred_region
      %v312 = vld [vmem:[#allocation2] sm:$0xff]
      %v313 = vld [vmem:[#allocation2 + $0x8] sm:$0xff]
      %314 = vst.msk [vmem:[#allocation3] sm:$0xff] %vm83, %v312
      %315 = vst.msk [vmem:[#allocation3 + $0x8] sm:$0xff] %vm83, %v313
    $region25: #{tpu_custom_call.1} parent=1 // pred_fallthru
      _
    // Predicated region
    $region26: #{tpu_custom_call.1} parent=1 // pred_check
      _
    $region27: #{tpu_custom_call.1} parent=1 // pred_check_branch
      %317 = sbr.rel (0) target = $region29
    $region28: #{tpu_custom_call.1} parent=1 // pred_region
      %s319 = ssub.s32 256, 256
      %320 = vsyncadd [#allocation4], %s319
      %s321 = sshll.u32 [#allocation3], 4
      %s322 = int_to_ptr.vmem [resolvable:$true] %s321
      %327 = dma.vmem_to_hbm [thread:$0]  %s322, 256, %s4, [#allocation4], 128, 128, 8
    $region29: #{tpu_custom_call.1} parent=1 // pred_fallthru
      _
    // Predicated region
    $region30: #{tpu_custom_call.1} parent=1 // pred_check
      _
    $region31: #{tpu_custom_call.1} parent=1 // pred_check_branch
      %329 = sbr.rel (0) target = $region33
    $region32: #{tpu_custom_call.1} parent=1 // pred_region
      %330 = dma.done [#allocation4], 256
    $region33: #{tpu_custom_call.1} parent=1 // pred_fallthru
      _
    %331 = vsyncpa [#allocation4], 1

</llo_original>
